<compile_context>
chip_gen: v5e
topology: v5e:2x2
jax: 0.10.0
libtpu: 0.0.40
codegen_flags: <defaults>
</compile_context>

<pallas_src>
import functools

import jax
import jax.numpy as jnp
from jax.experimental import pallas as pl
from jax.experimental.pallas import tpu as pltpu

EPS = 1e-9


def _listone_kernel(yp_ref, yt_ref, out_ref, *, inv_m, eps):
    # yp/yt tiles: [N, TC]  (N = full list length on sublanes, TC columns on lanes)
    yp = yp_ref[...] * jnp.float32(inv_m)       # y_pred / M
    yt = yt_ref[...] * jnp.float32(-inv_m)      # -y_true / M

    # numerically-stable softmax over the list axis (axis 0), per column (lane)
    p_exp = jnp.exp(yp - jnp.max(yp, axis=0, keepdims=True))
    p_inv_sum = 1.0 / jnp.sum(p_exp, axis=0, keepdims=True)        # [1, TC]
    pred_log = jnp.log(p_exp * p_inv_sum + jnp.float32(eps))       # log(softmax + 1e-9)

    t_exp = jnp.exp(yt - jnp.max(yt, axis=0, keepdims=True))
    t_inv_sum = 1.0 / jnp.sum(t_exp, axis=0, keepdims=True)        # [1, TC]
    true_max = t_exp * t_inv_sum

    # per-column contribution: -sum over the list axis
    out_ref[...] = -jnp.sum(true_max * pred_log, axis=0, keepdims=True)  # [1, TC]


def list_one_loss(y_pred, y_true, *, M=1.0, eps=EPS, col_tile=128):
    """Pallas-backed ListOneLoss.forward.

    y_pred / y_true: [N] or [N, C]; softmax runs over dim 0 (as in the PyTorch
    module); the final scalar is the sum over all elements of
    -true_max * log(pred_max), which equals torch.mean(-torch.sum(...)).
    """
    y_pred = jnp.asarray(y_pred, jnp.float32)
    y_true = jnp.asarray(y_true, jnp.float32)
    if y_pred.ndim == 1:
        y_pred = y_pred[:, None]
        y_true = y_true[:, None]
    N, C = y_pred.shape

    # Columns are independent -> tile the lane axis when it is 128-aligned,
    # otherwise fall back to one full-extent block (satisfies the (8,128) rule
    # because the block then equals the full array dims).
    tc = col_tile if (C >= col_tile and C % col_tile == 0) else C
    grid = (C // tc,)

    kernel = functools.partial(_listone_kernel, inv_m=1.0 / float(M), eps=eps)

    partials = pl.pallas_call(
        kernel,
        out_shape=jax.ShapeDtypeStruct((1, C), jnp.float32),
        grid_spec=pltpu.PrefetchScalarGridSpec(
            num_scalar_prefetch=0,
            grid=grid,
            in_specs=[
                pl.BlockSpec((N, tc), lambda j: (0, j)),
                pl.BlockSpec((N, tc), lambda j: (0, j)),
            ],
            out_specs=pl.BlockSpec((1, tc), lambda j: (0, j)),
        ),
        compiler_params=pltpu.CompilerParams(
            dimension_semantics=("parallel",),   # v7x megacore can split columns
            vmem_limit_bytes=64 * 1024 * 1024,
        ),
        cost_estimate=pl.CostEstimate(
            flops=12 * N * C,
            transcendentals=3 * N * C,           # exp + exp + log per element
            bytes_accessed=(2 * N * C + C) * 4,
        ),
    )(y_pred, y_true)

    # torch.sum(...) with no dim sums everything -> torch.mean of a scalar is a
    # no-op; total loss is just the sum of the per-column partials.
    return jnp.sum(partials)


def list_one_loss_ref(y_pred, y_true, *, M=1.0, eps=EPS):
    """Pure-JAX reference mirroring the PyTorch module exactly."""
    yp = jnp.asarray(y_pred, jnp.float32)
    yt = jnp.asarray(y_true, jnp.float32)
    pred_max = jax.nn.softmax(yp / M, axis=0) + eps
    true_max = jax.nn.softmax(-yt / M, axis=0)
    pred_log = jnp.log(pred_max)
    return jnp.mean(-jnp.sum(true_max * pred_log))


if __name__ == "__main__":
    key = jax.random.PRNGKey(0)
    k1, k2, k3, k4 = jax.random.split(key, 4)

    # small shape (single-block path): list length 16, 8 independent columns
    yp_s = jax.random.normal(k1, (16, 8), dtype=jnp.float32)
    yt_s = jax.random.uniform(k2, (16, 8), dtype=jnp.float32, minval=0.0, maxval=5.0)
    loss_s = jax.block_until_ready(list_one_loss(yp_s, yt_s))
    ref_s = jax.block_until_ready(list_one_loss_ref(yp_s, yt_s))
    assert jnp.isfinite(loss_s), "kernel produced non-finite loss"
    assert abs(float(loss_s) - float(ref_s)) <= 1e-4 * max(1.0, abs(float(ref_s))), (
        f"mismatch (small): kernel={float(loss_s)} ref={float(ref_s)}")

    # wider shape exercising the column-tiled, megacore-parallel grid path
    yp_w = jax.random.normal(k3, (32, 256), dtype=jnp.float32)
    yt_w = jax.random.uniform(k4, (32, 256), dtype=jnp.float32, minval=0.0, maxval=5.0)
    loss_w = jax.block_until_ready(list_one_loss(yp_w, yt_w))
    ref_w = jax.block_until_ready(list_one_loss_ref(yp_w, yt_w))
    assert jnp.isfinite(loss_w), "kernel produced non-finite loss"
    assert abs(float(loss_w) - float(ref_w)) <= 1e-4 * max(1.0, abs(float(ref_w))), (
        f"mismatch (wide): kernel={float(loss_w)} ref={float(ref_w)}")

    print("KERNEL_OK")
</pallas_src>

<mosaic_0001>
module attributes {stable_mosaic.version = 11 : i64} {
  func.func @_listone_kernel(%arg0: i32, %arg1: memref<16x8xf32, #tpu.memory_space<vmem>>, %arg2: memref<16x8xf32, #tpu.memory_space<vmem>>, %arg3: memref<1x8xf32, #tpu.memory_space<vmem>>) attributes {dimension_semantics = [#tpu.dimension_semantics<parallel>], iteration_bounds = array<i64: 1>, scalar_prefetch = 0 : i64, scratch_operands = 0 : i64, tpu.core_type = #tpu.core_type<tc>, window_params = [{transform_indices = @transform_0, window_bounds = array<i64: 16, 8>}, {transform_indices = @transform_1, window_bounds = array<i64: 16, 8>}, {transform_indices = @transform_2, window_bounds = array<i64: 1, 8>}]} {
    %c0 = arith.constant 0 : index
    %c0_0 = arith.constant 0 : index
    %0 = vector.load %arg1[%c0, %c0_0] : memref<16x8xf32, #tpu.memory_space<vmem>>, vector<16x8xf32>
    %cst = arith.constant 1.000000e+00 : f32
    %1 = vector.broadcast %cst : f32 to vector<16x8xf32>
    %2 = arith.mulf %0, %1 : vector<16x8xf32>
    %c0_1 = arith.constant 0 : index
    %c0_2 = arith.constant 0 : index
    %3 = vector.load %arg2[%c0_1, %c0_2] : memref<16x8xf32, #tpu.memory_space<vmem>>, vector<16x8xf32>
    %cst_3 = arith.constant -1.000000e+00 : f32
    %4 = vector.broadcast %cst_3 : f32 to vector<16x8xf32>
    %5 = arith.mulf %3, %4 : vector<16x8xf32>
    %cst_4 = arith.constant dense<0xFF800000> : vector<8xf32>
    %6 = vector.multi_reduction <maximumf>, %2, %cst_4 [0] : vector<16x8xf32> to vector<8xf32>
    %7 = vector.shape_cast %6 : vector<8xf32> to vector<1x8xf32>
    %8 = vector.broadcast %7 : vector<1x8xf32> to vector<16x8xf32>
    %9 = arith.subf %2, %8 : vector<16x8xf32>
    %10 = math.exp %9 : vector<16x8xf32>
    %cst_5 = arith.constant dense<0.000000e+00> : vector<8xf32>
    %11 = vector.multi_reduction <add>, %10, %cst_5 [0] : vector<16x8xf32> to vector<8xf32>
    %12 = vector.shape_cast %11 : vector<8xf32> to vector<1x8xf32>
    %cst_6 = arith.constant 1.000000e+00 : f32
    %13 = vector.broadcast %cst_6 : f32 to vector<1x8xf32>
    %14 = arith.divf %13, %12 : vector<1x8xf32>
    %15 = vector.broadcast %14 : vector<1x8xf32> to vector<16x8xf32>
    %16 = arith.mulf %10, %15 : vector<16x8xf32>
    %cst_7 = arith.constant 9.99999971E-10 : f32
    %17 = vector.broadcast %cst_7 : f32 to vector<16x8xf32>
    %18 = arith.addf %16, %17 : vector<16x8xf32>
    %19 = math.log %18 : vector<16x8xf32>
    %cst_8 = arith.constant dense<0xFF800000> : vector<8xf32>
    %20 = vector.multi_reduction <maximumf>, %5, %cst_8 [0] : vector<16x8xf32> to vector<8xf32>
    %21 = vector.shape_cast %20 : vector<8xf32> to vector<1x8xf32>
    %22 = vector.broadcast %21 : vector<1x8xf32> to vector<16x8xf32>
    %23 = arith.subf %5, %22 : vector<16x8xf32>
    %24 = math.exp %23 : vector<16x8xf32>
    %cst_9 = arith.constant dense<0.000000e+00> : vector<8xf32>
    %25 = vector.multi_reduction <add>, %24, %cst_9 [0] : vector<16x8xf32> to vector<8xf32>
    %26 = vector.shape_cast %25 : vector<8xf32> to vector<1x8xf32>
    %cst_10 = arith.constant 1.000000e+00 : f32
    %27 = vector.broadcast %cst_10 : f32 to vector<1x8xf32>
    %28 = arith.divf %27, %26 : vector<1x8xf32>
    %29 = vector.broadcast %28 : vector<1x8xf32> to vector<16x8xf32>
    %30 = arith.mulf %24, %29 : vector<16x8xf32>
    %31 = arith.mulf %30, %19 : vector<16x8xf32>
    %cst_11 = arith.constant dense<0.000000e+00> : vector<8xf32>
    %32 = vector.multi_reduction <add>, %31, %cst_11 [0] : vector<16x8xf32> to vector<8xf32>
    %33 = vector.shape_cast %32 : vector<8xf32> to vector<1x8xf32>
    %cst_12 = arith.constant 0.000000e+00 : f32
    %34 = vector.broadcast %cst_12 : f32 to vector<1x8xf32>
    %35 = arith.subf %34, %33 : vector<1x8xf32>
    %c0_13 = arith.constant 0 : index
    %c0_14 = arith.constant 0 : index
    %36 = vector.load %arg3[%c0_13, %c0_14] : memref<1x8xf32, #tpu.memory_space<vmem>>, vector<1x8xf32>
    tpu.vector_store %arg3[%c0_13, %c0_14], %35 {strides = array<i32>} : memref<1x8xf32, #tpu.memory_space<vmem>>, vector<1x8xf32>,
    return
  }
  func.func @transform_0(%arg0: i32) -> (i32, i32) {
    %c0_i32 = arith.constant 0 : i32
    %c0_i32_0 = arith.constant 0 : i32
    return %c0_i32, %arg0 : i32, i32
  }
  func.func @transform_1(%arg0: i32) -> (i32, i32) {
    %c0_i32 = arith.constant 0 : i32
    %c0_i32_0 = arith.constant 0 : i32
    return %c0_i32, %arg0 : i32, i32
  }
  func.func @transform_2(%arg0: i32) -> (i32, i32) {
    %c0_i32 = arith.constant 0 : i32
    %c0_i32_0 = arith.constant 0 : i32
    return %c0_i32, %arg0 : i32, i32
  }
}

</mosaic_0001>

<llo_original>
// kernel: tpu_custom_call.1
$region0: #{tpu_custom_call.1}
  #allocation0 [shape = 'u32[]', space=smem, size = 0x4, offset = 0x4, fixed_abs, tag = 'smem constant byte address 0x4 - core index']
  #allocation1 [shape = 'u32[72,128]{1,0:T(1,128)}', space=vmem, size = 0x9000, scoped, tag = 'internal scratch']
  %s0 = inlined_call_operand.vmem [shape: f32[16,8], index: 0, kind: input, shape index: {}]
  %s1 = inlined_call_operand.vmem [shape: f32[16,8], index: 1, kind: input, shape index: {}]
  %s2 = inlined_call_operand.hbm [shape: f32[1,8], index: 2, kind: output, shape index: {}]
  %s3 = sld [smem:[#allocation0]]
  $region18: #{tpu_custom_call.1} parent=0
    _
  %s5 = ssub.s32 1, %s3
  %s6 = scalar_select 0, %s5, %s3
  $region1: #{tpu_custom_call.1} parent=0
    #allocation2 [shape = 'u8[512]{0}', space=vmem, size = 0x400, scoped, tag = 'output window, operand 0, single buffered']
    #allocation3 [shape = 's32[1]{0}', space=sflag, size = 0x4, scoped, tag = 'scoped memory for tpu_custom_call.1']
    %7 = vsyncpa [#allocation3], 0
    // Predicated region
    $region2: #{tpu_custom_call.1} parent=1 // pred_check
      _
    $region3: #{tpu_custom_call.1} parent=1 // pred_check_branch
      %9 = sbr.rel (0) target = $region5
    $region4: #{tpu_custom_call.1} parent=1 // pred_region
      _
    $region5: #{tpu_custom_call.1} parent=1 // pred_fallthru
      _
    // Predicated region
    $region6: #{tpu_custom_call.1} parent=1 // pred_check
      _
    $region7: #{tpu_custom_call.1} parent=1 // pred_check_branch
      %11 = sbr.rel (0) target = $region9
    $region8: #{tpu_custom_call.1} parent=1 // pred_region
      _
    $region9: #{tpu_custom_call.1} parent=1 // pred_fallthru
      _
    %v12 = vld [vmem:[%s0] sm:$0xff]
    %v13 = vld [vmem:[%s0 + $0x8] sm:$0xff]
    %v14 = vld [vmem:[%s1] sm:$0xff]
    %v15 = vld [vmem:[%s1 + $0x8] sm:$0xff]
    %v16 = vmul.f32 %v14, -1.0
    %v17 = vmul.f32 %v15, -1.0
    %vm18 = vcmask 64512
    %v19 = vsel %vm18, %v12, -inf
    %v20 = vsel %vm18, %v13, -inf
    %v21 = vmax.f32 %v19, %v20
    %v22 = vrot.slane %v21, 4
    %v23 = vmax.f32 %v21, %v22
    %v24 = vrot.slane %v23, 2
    %v25 = vmax.f32 %v23, %v24
    %v26 = vrot.slane %v25, 1
    %v27 = vmax.f32 %v25, %v26
    %v28 = vsub.f32 %v12, %v27
    %v29 = vsub.f32 %v13, %v27
    %v30 = vmul.f32 %v28, 1.442695
    %v31 = vpow.pop %v30
    %v32 = vmul.f32 %v29, 1.442695
    %v33 = vpow.pop %v32
    %v34 = vsel %vm18, %v31, 0.0
    %v35 = vsel %vm18, %v33, 0.0
    %v36 = vadd.f32 %v34, %v35
    %v37 = vrot.slane %v36, 4
    %v38 = vadd.f32 %v36, %v37
    %v39 = vrot.slane %v38, 2
    %v40 = vadd.f32 %v38, %v39
    %v41 = vrot.slane %v40, 1
    %v42 = vadd.f32 %v40, %v41
    %v43 = vrcp.pop %v42
    %v44 = vmul.f32 %v42, %v43
    %v45 = vsub.f32 1.0, %v44
    %v46 = vmul.f32 %v43, %v45
    %v47 = vadd.f32 %v43, %v46
    %vm48 = vweird.f32 %v42
    %vm49 = vweird.f32 %v43
    %vm50 = vmor %vm48, %vm49
    %v51 = vsel %vm50, %v43, %v47
    %v52 = vand.u32 2147483647, %v42
    %vm53 = vcmp.eq.f32.partialorder %v52, 8.507059e+37
    %v54 = vand.u32 %v42, 2147483648
    %v55 = vor.u32 1.1754944e-38, %v54
    %v56 = vsel %vm53, %v55, %v51
    %v57 = vmul.f32 1.0, %v56
    %v58 = vmul.f32 %v31, %v57
    %v59 = vmul.f32 %v33, %v57
    %v60 = vadd.f32 %v58, 1e-09
    %v61 = vadd.f32 %v59, 1e-09
    %v62 = vlog2.pop %v60
    %v63 = vmul.f32 %v62, 0.6931472
    %v64 = vlog2.pop %v61
    %v65 = vmul.f32 %v64, 0.6931472
    %v66 = vsel %vm18, %v16, -inf
    %v67 = vsel %vm18, %v17, -inf
    %v68 = vmax.f32 %v66, %v67
    %v69 = vrot.slane %v68, 4
    %v70 = vmax.f32 %v68, %v69
    %v71 = vrot.slane %v70, 2
    %v72 = vmax.f32 %v70, %v71
    %v73 = vrot.slane %v72, 1
    %v74 = vmax.f32 %v72, %v73
    %v75 = vsub.f32 %v16, %v74
    %v76 = vsub.f32 %v17, %v74
    %v77 = vmul.f32 %v75, 1.442695
    %v78 = vpow.pop %v77
    %v79 = vmul.f32 %v76, 1.442695
    %v80 = vpow.pop %v79
    %v81 = vsel %vm18, %v78, 0.0
    %v82 = vsel %vm18, %v80, 0.0
    %v83 = vadd.f32 %v81, %v82
    %v84 = vrot.slane %v83, 4
    %v85 = vadd.f32 %v83, %v84
    %v86 = vrot.slane %v85, 2
    %v87 = vadd.f32 %v85, %v86
    %v88 = vrot.slane %v87, 1
    %v89 = vadd.f32 %v87, %v88
    %v90 = vrcp.pop %v89
    %v91 = vmul.f32 %v89, %v90
    %v92 = vsub.f32 1.0, %v91
    %v93 = vmul.f32 %v90, %v92
    %v94 = vadd.f32 %v90, %v93
    %vm95 = vweird.f32 %v89
    %vm96 = vweird.f32 %v90
    %vm97 = vmor %vm95, %vm96
    %v98 = vsel %vm97, %v90, %v94
    %v99 = vand.u32 2147483647, %v89
    %vm100 = vcmp.eq.f32.partialorder %v99, 8.507059e+37
    %v101 = vand.u32 %v89, 2147483648
    %v102 = vor.u32 1.1754944e-38, %v101
    %v103 = vsel %vm100, %v102, %v98
    %v104 = vmul.f32 1.0, %v103
    %v105 = vmul.f32 %v78, %v104
    %v106 = vmul.f32 %v80, %v104
    %v107 = vmul.f32 %v105, %v63
    %v108 = vmul.f32 %v106, %v65
    %v109 = vsel %vm18, %v107, 0.0
    %v110 = vsel %vm18, %v108, 0.0
    %v111 = vadd.f32 %v109, %v110
    %v112 = vrot.slane %v111, 4
    %v113 = vadd.f32 %v111, %v112
    %v114 = vrot.slane %v113, 2
    %v115 = vadd.f32 %v113, %v114
    %v116 = vrot.slane %v115, 1
    %v117 = vadd.f32 %v115, %v116
    %v118 = vsub.f32 0.0, %v117
    %vm119 = vcmask 57344
    %120 = vst.msk [vmem:[#allocation2] sm:$0x1] %vm119, %v118
    // Predicated region
    $region10: #{tpu_custom_call.1} parent=1 // pred_check
      _
    $region11: #{tpu_custom_call.1} parent=1 // pred_check_branch
      %122 = sbr.rel (0) target = $region13
    $region12: #{tpu_custom_call.1} parent=1 // pred_region
      %124 = vsyncadd [#allocation3], 0
      %s126 = sshll.u32 [#allocation2], 4
      %s127 = int_to_ptr.vmem [resolvable:$true] %s126
      %s128 = sshll.u32 %s2, 4
      %s129 = int_to_ptr.hbm [resolvable:$true] %s128
      %131 = dma.vmem_to_hbm [thread:$0]  %s127, 16, %s129, [#allocation3]
    $region13: #{tpu_custom_call.1} parent=1 // pred_fallthru
      _
    // Predicated region
    $region14: #{tpu_custom_call.1} parent=1 // pred_check
      _
    $region15: #{tpu_custom_call.1} parent=1 // pred_check_branch
      %133 = sbr.rel (0) target = $region17
    $region16: #{tpu_custom_call.1} parent=1 // pred_region
      %135 = dma.done [#allocation3], 16
    $region17: #{tpu_custom_call.1} parent=1 // pred_fallthru
      _
    %136 = vsyncpa [#allocation3], 1

</llo_original>
